<compile_context>
chip_gen: v7x
topology: tpu7x:2x2x1
jax: 0.10.0
libtpu: 0.0.40
codegen_flags: <defaults>
</compile_context>

<pallas_src>
import functools

import jax
import jax.numpy as jnp
from jax.experimental import pallas as pl
from jax.experimental.pallas import tpu as pltpu

IN_FEATURES = 784
OUT_FEATURES = 10
OUT_PADDED = 128          # lane-dense output width (multiple of 128)
DEFAULT_TILE_N = 1024     # f32 x tile ~3.2 MiB; x2 buffers + W + out ~7 MiB


def _round_up(x, m):
    return ((x + m - 1) // m) * m


def linear_kernel(x_ref, w_ref, b_ref, o_ref):
    # x_ref: (TILE_N, 784) native dtype (f32)  -> cast to bf16 on the VPU
    # w_ref: (784, 128) bf16 (resident)        b_ref: (1, 128) f32 (resident)
    # o_ref: (TILE_N, 128) bf16 (lane-dense writeback)
    x_bf16 = x_ref[...].astype(jnp.bfloat16)
    acc = jnp.dot(x_bf16, w_ref[...], preferred_element_type=jnp.float32)
    o_ref[...] = (acc + b_ref[...]).astype(jnp.bfloat16)


def prepare_params(weight, bias):
    """One-time prep: transpose, pad to 128 lanes, cast weight to bf16."""
    w_t = jnp.zeros((IN_FEATURES, OUT_PADDED), jnp.bfloat16)
    w_t = w_t.at[:, :OUT_FEATURES].set(weight.T.astype(jnp.bfloat16))
    b_p = jnp.zeros((1, OUT_PADDED), jnp.float32)
    b_p = b_p.at[:, :OUT_FEATURES].set(bias.astype(jnp.float32))
    return w_t, b_p


@functools.partial(jax.jit, static_argnames=("tile_n",))
def net_forward(x, w_t, b_p, *, tile_n=DEFAULT_TILE_N):
    """Pallas equivalent of Net.forward.

    Args:
      x:   any shape whose trailing dims flatten to 784 (e.g. (N,1,28,28)).
      w_t: (784, 128) bf16, from prepare_params.
      b_p: (1, 128) f32, from prepare_params.
    Returns:
      (N, 10) float32 logits.
    """
    x2d = x.reshape(-1, IN_FEATURES)   # contiguous view; NO dtype cast here
    n = x2d.shape[0]

    # Row-axis tiling: sublane-aligned (multiple of 8), and >= 2 grid steps
    # whenever the batch allows so dimension_semantics=("parallel",) can shard
    # across both v7x TensorCores. No padding of x: the ragged last block's
    # OOB reads are junk and its OOB writes are masked by Pallas.
    eff_tile = max(8, min(tile_n, _round_up(pl.cdiv(n, 2), 8)))
    grid = (pl.cdiv(n, eff_tile),)

    cost = pl.CostEstimate(
        flops=2 * n * IN_FEATURES * OUT_PADDED,
        transcendentals=0,
        bytes_accessed=(n * IN_FEATURES * x2d.dtype.itemsize   # x (native)
                        + IN_FEATURES * OUT_PADDED * 2         # W (bf16)
                        + n * OUT_PADDED * 2),                 # out (bf16)
    )

    out = pl.pallas_call(
        linear_kernel,
        out_shape=jax.ShapeDtypeStruct((n, OUT_PADDED), jnp.bfloat16),
        grid_spec=pl.GridSpec(
            grid=grid,
            in_specs=[
                pl.BlockSpec((eff_tile, IN_FEATURES), lambda i: (i, 0)),
                pl.BlockSpec((IN_FEATURES, OUT_PADDED), lambda i: (0, 0)),
                pl.BlockSpec((1, OUT_PADDED), lambda i: (0, 0)),
            ],
            out_specs=pl.BlockSpec((eff_tile, OUT_PADDED), lambda i: (i, 0)),
        ),
        compiler_params=pltpu.CompilerParams(
            dimension_semantics=("parallel",)),
        cost_estimate=cost,
    )(x2d, w_t, b_p)

    # (N, 10) f32 logits to match the PyTorch reference; callers that can
    # consume the padded bf16 (N, 128) buffer directly should take `out`
    # instead and fuse the slice into the consumer.
    return out[:, :OUT_FEATURES].astype(jnp.float32)


if __name__ == "__main__":
    key = jax.random.PRNGKey(0)
    kx, kw, kb, kx2 = jax.random.split(key, 4)

    # Deterministic parameter init (mimics nn.Linear(784, 10) shapes).
    bound = 1.0 / (IN_FEATURES ** 0.5)
    weight = jax.random.uniform(
        kw, (OUT_FEATURES, IN_FEATURES), jnp.float32, -bound, bound)
    bias = jax.random.uniform(kb, (OUT_FEATURES,), jnp.float32, -bound, bound)
    w_t, b_p = prepare_params(weight, bias)

    # Case 1: small MNIST-like batch (N, C, H, W) = (8, 1, 28, 28).
    x = jax.random.normal(kx, (8, 1, 28, 28), jnp.float32)
    out = jax.block_until_ready(net_forward(x, w_t, b_p))
    ref = x.reshape(-1, IN_FEATURES) @ weight.T + bias
    assert out.shape == (8, OUT_FEATURES)
    assert out.dtype == jnp.float32
    assert jnp.allclose(out, ref, atol=5e-2, rtol=5e-2), "case-1 mismatch"

    # Case 2: batch that is not a multiple of the tile -> exercises the ragged
    # last grid block (grid=2, second block reads 8 OOB rows, writes masked).
    x2 = jax.random.normal(kx2, (200, 784), jnp.float32)
    out2 = jax.block_until_ready(net_forward(x2, w_t, b_p))
    ref2 = x2 @ weight.T + bias
    assert out2.shape == (200, OUT_FEATURES)
    assert jnp.allclose(out2, ref2, atol=5e-2, rtol=5e-2), "case-2 mismatch"

    print("KERNEL_OK")
</pallas_src>

<mosaic_0001>
module attributes {stable_mosaic.version = 11 : i64} {
  func.func @linear_kernel(%arg0: i32, %arg1: memref<8x784xf32, #tpu.memory_space<vmem>>, %arg2: memref<784x128xbf16, #tpu.memory_space<vmem>>, %arg3: memref<1x128xf32, #tpu.memory_space<vmem>>, %arg4: memref<8x128xbf16, #tpu.memory_space<vmem>>) attributes {dimension_semantics = [#tpu.dimension_semantics<parallel>], iteration_bounds = array<i64: 1>, scalar_prefetch = 0 : i64, scratch_operands = 0 : i64, tpu.core_type = #tpu.core_type<tc>, window_params = [{transform_indices = @transform_0, window_bounds = array<i64: 8, 784>}, {pipeline_mode = #tpu.pipeline_mode<synchronous>, transform_indices = @transform_1, window_bounds = array<i64: 784, 128>}, {pipeline_mode = #tpu.pipeline_mode<synchronous>, transform_indices = @transform_2, window_bounds = array<i64: 1, 128>}, {transform_indices = @transform_3, window_bounds = array<i64: 8, 128>}]} {
    %c0 = arith.constant 0 : index
    %c0_0 = arith.constant 0 : index
    %0 = vector.load %arg1[%c0, %c0_0] : memref<8x784xf32, #tpu.memory_space<vmem>>, vector<8x784xf32>
    %1 = arith.truncf %0 : vector<8x784xf32> to vector<8x784xbf16>
    %c0_1 = arith.constant 0 : index
    %c0_2 = arith.constant 0 : index
    %2 = vector.load %arg2[%c0_1, %c0_2] : memref<784x128xbf16, #tpu.memory_space<vmem>>, vector<784x128xbf16>
    %cst = arith.constant dense<0.000000e+00> : vector<8x128xf32>
    %3 = tpu.matmul %1, %2, %cst {dimension_numbers = #tpu.dot_dimension_numbers<[1], [0], [0], [1], [0, 0, 1, 1], [], []>} : vector<8x784xbf16>, vector<784x128xbf16>, vector<8x128xf32> -> vector<8x128xf32>
    %c0_3 = arith.constant 0 : index
    %c0_4 = arith.constant 0 : index
    %4 = vector.load %arg3[%c0_3, %c0_4] : memref<1x128xf32, #tpu.memory_space<vmem>>, vector<1x128xf32>
    %5 = vector.broadcast %4 : vector<1x128xf32> to vector<8x128xf32>
    %6 = arith.addf %3, %5 : vector<8x128xf32>
    %7 = arith.truncf %6 : vector<8x128xf32> to vector<8x128xbf16>
    %c0_5 = arith.constant 0 : index
    %c0_6 = arith.constant 0 : index
    %8 = vector.load %arg4[%c0_5, %c0_6] : memref<8x128xbf16, #tpu.memory_space<vmem>>, vector<8x128xbf16>
    tpu.vector_store %arg4[%c0_5, %c0_6], %7 {strides = array<i32>} : memref<8x128xbf16, #tpu.memory_space<vmem>>, vector<8x128xbf16>,
    return
  }
  func.func @transform_0(%arg0: i32) -> (i32, i32) {
    %c0_i32 = arith.constant 0 : i32
    %c0_i32_0 = arith.constant 0 : i32
    return %arg0, %c0_i32 : i32, i32
  }
  func.func @transform_1(%arg0: i32) -> (i32, i32) {
    %c0_i32 = arith.constant 0 : i32
    %c0_i32_0 = arith.constant 0 : i32
    %c0_i32_1 = arith.constant 0 : i32
    return %c0_i32, %c0_i32_0 : i32, i32
  }
  func.func @transform_2(%arg0: i32) -> (i32, i32) {
    %c0_i32 = arith.constant 0 : i32
    %c0_i32_0 = arith.constant 0 : i32
    %c0_i32_1 = arith.constant 0 : i32
    return %c0_i32, %c0_i32_0 : i32, i32
  }
  func.func @transform_3(%arg0: i32) -> (i32, i32) {
    %c0_i32 = arith.constant 0 : i32
    %c0_i32_0 = arith.constant 0 : i32
    return %arg0, %c0_i32 : i32, i32
  }
}

</mosaic_0001>

<llo_original>
// kernel: net_forward.1
$region0: #{net_forward.1}
  #allocation0 [shape = 'u32[]', space=smem, size = 0x4, offset = 0x4, fixed_abs, tag = 'smem constant byte address 0x4 - core index']
  #allocation1 [shape = 'u32[144,128]{1,0:T(1,128)}', space=vmem, size = 0x12000, scoped, tag = 'internal scratch']
  %s0 = inlined_call_operand.vmem [shape: f32[8,784], index: 0, kind: input, shape index: {}]
  %s1 = inlined_call_operand.vmem [shape: bf16[784,128], index: 1, kind: input, shape index: {}]
  %s2 = inlined_call_operand.vmem [shape: f32[1,128], index: 2, kind: input, shape index: {}]
  %s3 = inlined_call_operand.vmem [shape: bf16[8,128], index: 3, kind: output, shape index: {}]
  %s4 = sld [smem:[#allocation0]]
  $region22: #{net_forward.1} parent=0
    _
  %s6 = ssub.s32 1, %s4
  %s7 = scalar_select 0, %s6, %s4
  // Predicated region
  $region2: #{net_forward.1} parent=0 // pred_check
    _
  $region3: #{net_forward.1} parent=0 // pred_check_branch
    %9 = sbr.rel (0) target = $region5
  $region4: #{net_forward.1} parent=0 // pred_region
    _
  $region5: #{net_forward.1} parent=0 // pred_fallthru
    _
  // Predicated region
  $region6: #{net_forward.1} parent=0 // pred_check
    _
  $region7: #{net_forward.1} parent=0 // pred_check_branch
    %11 = sbr.rel (0) target = $region9
  $region8: #{net_forward.1} parent=0 // pred_region
    _
  $region9: #{net_forward.1} parent=0 // pred_fallthru
    _
  // Predicated region
  $region10: #{net_forward.1} parent=0 // pred_check
    _
  $region11: #{net_forward.1} parent=0 // pred_check_branch
    %13 = sbr.rel (0) target = $region13
  $region12: #{net_forward.1} parent=0 // pred_region
    _
  $region13: #{net_forward.1} parent=0 // pred_fallthru
    _
  %v15 = vld [vmem:[%s0] sm:$0xff]
  %v16 = vld [vmem:[%s0 + $0x8] sm:$0xff]
  %v17 = vld [vmem:[%s0 + $0x10] sm:$0xff]
  %v18 = vld [vmem:[%s0 + $0x18] sm:$0xff]
  %v19 = vld [vmem:[%s0 + $0x20] sm:$0xff]
  %v20 = vld [vmem:[%s0 + $0x28] sm:$0xff]
  %v21 = vld [vmem:[%s0 + $0x30] sm:$0xff]
  %v22 = vpack.c.bf16 %v15, %v15
  %v23 = vpack.c.bf16 %v16, %v16
  %v24 = vpack.c.bf16 %v17, %v17
  %v25 = vpack.c.bf16 %v18, %v18
  %v26 = vpack.c.bf16 %v19, %v19
  %v27 = vpack.c.bf16 %v20, %v20
  %v28 = vpack.c.bf16 %v21, %v21
  %v29 = vld [vmem:[%s1] sm:$0xf]
  %v30 = vld [vmem:[%s1 + $0x4] sm:$0xf]
  %v31 = vld [vmem:[%s1 + $0x8] sm:$0xf]
  %v32 = vld [vmem:[%s1 + $0xc] sm:$0xf]
  %v33 = vld [vmem:[%s1 + $0x10] sm:$0xf]
  %v34 = vld [vmem:[%s1 + $0x14] sm:$0xf]
  %v35 = vld [vmem:[%s1 + $0x18] sm:$0xf]
  %v36 = vld [vmem:[%s1 + $0x1c] sm:$0xf]
  %v37 = vld [vmem:[%s1 + $0x20] sm:$0xf]
  %v38 = vld [vmem:[%s1 + $0x24] sm:$0xf]
  %v39 = vld [vmem:[%s1 + $0x28] sm:$0xf]
  %v40 = vld [vmem:[%s1 + $0x2c] sm:$0xf]
  %v41 = vld [vmem:[%s1 + $0x30] sm:$0xf]
  %v42 = vld [vmem:[%s1 + $0x34] sm:$0xf]
  %v43 = vld [vmem:[%s1 + $0x38] sm:$0xf]
  %v44 = vld [vmem:[%s1 + $0x3c] sm:$0xf]
  %v45 = vld [vmem:[%s1 + $0x40] sm:$0xf]
  %v46 = vld [vmem:[%s1 + $0x44] sm:$0xf]
  %v47 = vld [vmem:[%s1 + $0x48] sm:$0xf]
  %v48 = vld [vmem:[%s1 + $0x4c] sm:$0xf]
  %v49 = vld [vmem:[%s1 + $0x50] sm:$0xf]
  %v50 = vld [vmem:[%s1 + $0x54] sm:$0xf]
  %v51 = vld [vmem:[%s1 + $0x58] sm:$0xf]
  %v52 = vld [vmem:[%s1 + $0x5c] sm:$0xf]
  %v53 = vld [vmem:[%s1 + $0x60] sm:$0xf]
  %v54 = vld [vmem:[%s1 + $0x64] sm:$0xf]
  %v55 = vld [vmem:[%s1 + $0x68] sm:$0xf]
  %v56 = vld [vmem:[%s1 + $0x6c] sm:$0xf]
  %v57 = vld [vmem:[%s1 + $0x70] sm:$0xf]
  %v58 = vld [vmem:[%s1 + $0x74] sm:$0xf]
  %v59 = vld [vmem:[%s1 + $0x78] sm:$0xf]
  %v60 = vld [vmem:[%s1 + $0x7c] sm:$0xf]
  %v61 = vld [vmem:[%s1 + $0x80] sm:$0xf]
  %v62 = vld [vmem:[%s1 + $0x84] sm:$0xf]
  %v63 = vld [vmem:[%s1 + $0x88] sm:$0xf]
  %v64 = vld [vmem:[%s1 + $0x8c] sm:$0xf]
  %v65 = vld [vmem:[%s1 + $0x90] sm:$0xf]
  %v66 = vld [vmem:[%s1 + $0x94] sm:$0xf]
  %v67 = vld [vmem:[%s1 + $0x98] sm:$0xf]
  %v68 = vld [vmem:[%s1 + $0x9c] sm:$0xf]
  %v69 = vld [vmem:[%s1 + $0xa0] sm:$0xf]
  %v70 = vld [vmem:[%s1 + $0xa4] sm:$0xf]
  %v71 = vld [vmem:[%s1 + $0xa8] sm:$0xf]
  %v72 = vld [vmem:[%s1 + $0xac] sm:$0xf]
  %v73 = vld [vmem:[%s1 + $0xb0] sm:$0xf]
  %v74 = vld [vmem:[%s1 + $0xb4] sm:$0xf]
  %v75 = vld [vmem:[%s1 + $0xb8] sm:$0xf]
  %v76 = vld [vmem:[%s1 + $0xbc] sm:$0xf]
  %v77 = vld [vmem:[%s1 + $0xc0] sm:$0xf]
  %v78 = vld [vmem:[%s1 + $0xc4] sm:$0xf]
  %v79 = vld [vmem:[%s1 + $0xc8] sm:$0xf]
  %v80 = vld [vmem:[%s1 + $0xcc] sm:$0xf]
  %v81 = vld [vmem:[%s1 + $0xd0] sm:$0xf]
  %v82 = vld [vmem:[%s1 + $0xd4] sm:$0xf]
  %v83 = vld [vmem:[%s1 + $0xd8] sm:$0xf]
  %v84 = vld [vmem:[%s1 + $0xdc] sm:$0xf]
  %v85 = vld [vmem:[%s1 + $0xe0] sm:$0xf]
  %v86 = vld [vmem:[%s1 + $0xe4] sm:$0xf]
  %v87 = vld [vmem:[%s1 + $0xe8] sm:$0xf]
  %v88 = vld [vmem:[%s1 + $0xec] sm:$0xf]
  %v89 = vld [vmem:[%s1 + $0xf0] sm:$0xf]
  %v90 = vld [vmem:[%s1 + $0xf4] sm:$0xf]
  %v91 = vld [vmem:[%s1 + $0xf8] sm:$0xf]
  %v92 = vld [vmem:[%s1 + $0xfc] sm:$0xf]
  %v93 = vld [vmem:[%s1 + $0x100] sm:$0xf]
  %v94 = vld [vmem:[%s1 + $0x104] sm:$0xf]
  %v95 = vld [vmem:[%s1 + $0x108] sm:$0xf]
  %v96 = vld [vmem:[%s1 + $0x10c] sm:$0xf]
  %v97 = vld [vmem:[%s1 + $0x110] sm:$0xf]
  %v98 = vld [vmem:[%s1 + $0x114] sm:$0xf]
  %v99 = vld [vmem:[%s1 + $0x118] sm:$0xf]
  %v100 = vld [vmem:[%s1 + $0x11c] sm:$0xf]
  %v101 = vld [vmem:[%s1 + $0x120] sm:$0xf]
  %v102 = vld [vmem:[%s1 + $0x124] sm:$0xf]
  %v103 = vld [vmem:[%s1 + $0x128] sm:$0xf]
  %v104 = vld [vmem:[%s1 + $0x12c] sm:$0xf]
  %v105 = vld [vmem:[%s1 + $0x130] sm:$0xf]
  %v106 = vld [vmem:[%s1 + $0x134] sm:$0xf]
  %v107 = vld [vmem:[%s1 + $0x138] sm:$0xf]
  %v108 = vld [vmem:[%s1 + $0x13c] sm:$0xf]
  %v109 = vld [vmem:[%s1 + $0x140] sm:$0xf]
  %v110 = vld [vmem:[%s1 + $0x144] sm:$0xf]
  %v111 = vld [vmem:[%s1 + $0x148] sm:$0xf]
  %v112 = vld [vmem:[%s1 + $0x14c] sm:$0xf]
  %v113 = vld [vmem:[%s1 + $0x150] sm:$0xf]
  %v114 = vld [vmem:[%s1 + $0x154] sm:$0xf]
  %v115 = vld [vmem:[%s1 + $0x158] sm:$0xf]
  %v116 = vld [vmem:[%s1 + $0x15c] sm:$0xf]
  %v117 = vld [vmem:[%s1 + $0x160] sm:$0xf]
  %v118 = vld [vmem:[%s1 + $0x164] sm:$0xf]
  %v119 = vld [vmem:[%s1 + $0x168] sm:$0xf]
  %v120 = vld [vmem:[%s1 + $0x16c] sm:$0xf]
  %v121 = vld [vmem:[%s1 + $0x170] sm:$0xf]
  %v122 = vld [vmem:[%s1 + $0x174] sm:$0xf]
  %v123 = vld [vmem:[%s1 + $0x178] sm:$0xf]
  %v124 = vld [vmem:[%s1 + $0x17c] sm:$0xf]
  %v125 = vld [vmem:[%s1 + $0x180] sm:$0xf]
  %v126 = vld [vmem:[%s1 + $0x184] sm:$0xf]
  %v127 = vld [vmem:[%s2] sm:$0x1]
  %v129 = vlaneseq
  %v130 = vshrl.u32 %v129, 7
  %v131 = vsub.s32 0, %v130
  %v132 = vrot.slane %v127, %v131
  %v232 = vunpack.c.l.b16 %v29
  %v233 = vunpack.c.l.b16 %v30
  %v234 = vunpack.c.l.b16 %v31
  %v235 = vunpack.c.l.b16 %v32
  %v236 = vunpack.c.l.b16 %v33
  %v237 = vunpack.c.l.b16 %v34
  %v238 = vunpack.c.l.b16 %v35
  %v239 = vunpack.c.l.b16 %v36
  %v240 = vunpack.c.l.b16 %v37
  %v241 = vunpack.c.l.b16 %v38
  %v242 = vunpack.c.l.b16 %v39
  %v243 = vunpack.c.l.b16 %v40
  %v244 = vunpack.c.l.b16 %v41
  %v245 = vunpack.c.l.b16 %v42
  %v246 = vunpack.c.l.b16 %v43
  %v247 = vunpack.c.l.b16 %v44
  %v248 = vunpack.c.l.b16 %v45
  %v249 = vunpack.c.l.b16 %v46
  %v250 = vunpack.c.l.b16 %v47
  %v251 = vunpack.c.l.b16 %v48
  %v252 = vunpack.c.l.b16 %v49
  %v253 = vunpack.c.l.b16 %v50
  %v254 = vunpack.c.l.b16 %v51
  %v255 = vunpack.c.l.b16 %v52
  %v256 = vunpack.c.l.b16 %v53
  %v257 = vunpack.c.l.b16 %v54
  %v258 = vunpack.c.l.b16 %v55
  %v259 = vunpack.c.l.b16 %v56
  %v260 = vunpack.c.l.b16 %v57
  %v261 = vunpack.c.l.b16 %v58
  %v262 = vunpack.c.l.b16 %v59
  %v263 = vunpack.c.l.b16 %v60
  %v264 = vunpack.c.l.b16 %v61
  %v265 = vunpack.c.l.b16 %v62
  %v266 = vunpack.c.l.b16 %v63
  %v267 = vunpack.c.l.b16 %v64
  %v268 = vunpack.c.l.b16 %v65
  %v269 = vunpack.c.l.b16 %v66
  %v270 = vunpack.c.l.b16 %v67
  %v271 = vunpack.c.l.b16 %v68
  %v272 = vunpack.c.l.b16 %v69
  %v273 = vunpack.c.l.b16 %v70
  %v274 = vunpack.c.l.b16 %v71
  %v275 = vunpack.c.l.b16 %v72
  %v276 = vunpack.c.l.b16 %v73
  %v277 = vunpack.c.l.b16 %v74
  %v278 = vunpack.c.l.b16 %v75
  %v279 = vunpack.c.l.b16 %v76
  %v280 = vunpack.c.l.b16 %v77
  %v281 = vunpack.c.l.b16 %v78
  %v282 = vunpack.c.l.b16 %v79
  %v283 = vunpack.c.l.b16 %v80
  %v284 = vunpack.c.l.b16 %v81
  %v285 = vunpack.c.l.b16 %v82
  %v286 = vunpack.c.l.b16 %v83
  %v287 = vunpack.c.l.b16 %v84
  %v288 = vunpack.c.l.b16 %v85
  %v289 = vunpack.c.l.b16 %v86
  %v290 = vunpack.c.l.b16 %v87
  %v291 = vunpack.c.l.b16 %v88
  %v292 = vunpack.c.l.b16 %v89
  %v293 = vunpack.c.l.b16 %v90
  %v294 = vunpack.c.l.b16 %v91
  %v295 = vunpack.c.l.b16 %v92
  %v296 = vunpack.c.l.b16 %v93
  %v297 = vunpack.c.l.b16 %v94
  %v298 = vunpack.c.l.b16 %v95
  %v299 = vunpack.c.l.b16 %v96
  %v300 = vunpack.c.l.b16 %v97
  %v301 = vunpack.c.l.b16 %v98
  %v302 = vunpack.c.l.b16 %v99
  %v303 = vunpack.c.l.b16 %v100
  %v304 = vunpack.c.l.b16 %v101
  %v305 = vunpack.c.l.b16 %v102
  %v306 = vunpack.c.l.b16 %v103
  %v307 = vunpack.c.l.b16 %v104
  %v308 = vunpack.c.l.b16 %v105
  %v309 = vunpack.c.l.b16 %v106
  %v310 = vunpack.c.l.b16 %v107
  %v311 = vunpack.c.l.b16 %v108
  %v312 = vunpack.c.l.b16 %v109
  %v313 = vunpack.c.l.b16 %v110
  %v314 = vunpack.c.l.b16 %v111
  %v315 = vunpack.c.l.b16 %v112
  %v316 = vunpack.c.l.b16 %v113
  %v317 = vunpack.c.l.b16 %v114
  %v318 = vunpack.c.l.b16 %v115
  %v319 = vunpack.c.l.b16 %v116
  %v320 = vunpack.c.l.b16 %v117
  %v321 = vunpack.c.l.b16 %v118
  %v322 = vunpack.c.l.b16 %v119
  %v323 = vunpack.c.l.b16 %v120
  %v324 = vunpack.c.l.b16 %v121
  %v325 = vunpack.c.l.b16 %v122
  %v326 = vunpack.c.l.b16 %v123
  %v327 = vunpack.c.l.b16 %v124
  %v328 = vunpack.c.l.b16 %v125
  %v329 = vunpack.c.l.b16 %v126
  %v330 = vpack.c.b16 %v233, %v232
  %v331 = vpack.c.b16 %v235, %v234
  %v332 = vpack.c.b16 %v237, %v236
  %v333 = vpack.c.b16 %v239, %v238
  %v334 = vpack.c.b16 %v241, %v240
  %v335 = vpack.c.b16 %v243, %v242
  %v336 = vpack.c.b16 %v245, %v244
  %v337 = vpack.c.b16 %v247, %v246
  %v338 = vpack.c.b16 %v249, %v248
  %v339 = vpack.c.b16 %v251, %v250
  %v340 = vpack.c.b16 %v253, %v252
  %v341 = vpack.c.b16 %v255, %v254
  %v342 = vpack.c.b16 %v257, %v256
  %v343 = vpack.c.b16 %v259, %v258
  %v344 = vpack.c.b16 %v261, %v260
  %v345 = vpack.c.b16 %v263, %v262
  %v346 = vpack.c.b16 %v265, %v264
  %v347 = vpack.c.b16 %v267, %v266
  %v348 = vpack.c.b16 %v269, %v268
  %v349 = vpack.c.b16 %v271, %v270
  %v350 = vpack.c.b16 %v273, %v272
  %v351 = vpack.c.b16 %v275, %v274
  %v352 = vpack.c.b16 %v277, %v276
  %v353 = vpack.c.b16 %v279, %v278
  %v354 = vpack.c.b16 %v281, %v280
  %v355 = vpack.c.b16 %v283, %v282
  %v356 = vpack.c.b16 %v285, %v284
  %v357 = vpack.c.b16 %v287, %v286
  %v358 = vpack.c.b16 %v289, %v288
  %v359 = vpack.c.b16 %v291, %v290
  %v360 = vpack.c.b16 %v293, %v292
  %v361 = vpack.c.b16 %v295, %v294
  %v362 = vpack.c.b16 %v297, %v296
  %v363 = vpack.c.b16 %v299, %v298
  %v364 = vpack.c.b16 %v301, %v300
  %v365 = vpack.c.b16 %v303, %v302
  %v366 = vpack.c.b16 %v305, %v304
  %v367 = vpack.c.b16 %v307, %v306
  %v368 = vpack.c.b16 %v309, %v308
  %v369 = vpack.c.b16 %v311, %v310
  %v370 = vpack.c.b16 %v313, %v312
  %v371 = vpack.c.b16 %v315, %v314
  %v372 = vpack.c.b16 %v317, %v316
  %v373 = vpack.c.b16 %v319, %v318
  %v374 = vpack.c.b16 %v321, %v320
  %v375 = vpack.c.b16 %v323, %v322
  %v376 = vpack.c.b16 %v325, %v324
  %v377 = vpack.c.b16 %v327, %v326
  %v378 = vpack.c.b16 %v329, %v328
  %vm428 = vcmask 130048
  %v430 = vsel %vm428, %v28, 0
  %432 = vmatprep.subr.bf16.mxu0 0
  %433 = vmatpush1.bf16.msra.mxu0 %v330
  %434 = vmatprep.subr.bf16.mxu0 0
  %435 = vmatpush1.bf16.msra.mxu0 %v331
  %436 = vmatprep.subr.bf16.mxu0 0
  %437 = vmatpush1.bf16.msra.mxu0 %v332
  %438 = vmatprep.subr.bf16.mxu0 0
  %439 = vmatpush1.bf16.msra.mxu0 %v333
  %440 = vmatprep.subr.bf16.mxu0 0
  %441 = vmatpush1.bf16.msra.mxu0 %v334
  %442 = vmatprep.subr.bf16.mxu0 0
  %443 = vmatpush1.bf16.msra.mxu0 %v335
  %444 = vmatprep.subr.bf16.mxu0 0
  %445 = vmatpush1.bf16.msra.mxu0 %v336
  %446 = vmatprep.subr.bf16.mxu0 0
  %447 = vmatpush1.bf16.msra.mxu0 %v337
  %448 = vmatprep.subr.bf16.mxu0 0
  %449 = vmatpush1.bf16.msra.mxu0 %v338
  %450 = vmatprep.subr.bf16.mxu0 0
  %451 = vmatpush1.bf16.msra.mxu0 %v339
  %452 = vmatprep.subr.bf16.mxu0 0
  %453 = vmatpush1.bf16.msra.mxu0 %v340
  %454 = vmatprep.subr.bf16.mxu0 0
  %455 = vmatpush1.bf16.msra.mxu0 %v341
  %456 = vmatprep.subr.bf16.mxu0 0
  %457 = vmatpush1.bf16.msra.mxu0 %v342
  %458 = vmatprep.subr.bf16.mxu0 0
  %459 = vmatpush1.bf16.msra.mxu0 %v343
  %460 = vmatprep.subr.bf16.mxu0 0
  %461 = vmatpush1.bf16.msra.mxu0 %v344
  %462 = vmatprep.subr.bf16.mxu0 0
  %463 = vmatpush1.bf16.msra.mxu0 %v345
  %464 = vmatprep.mubr.bf16.mxu0 %v23
  %465 = vmatmul.mubr.bf16.gmra.mrb[0].mxu0 %v22
  %v466 = vpop.f32.mrb[0].mxu0
  %v467 = vadd.f32 %v132, %v466
  %v468 = vpop.f32.mrb[0].mxu0
  %v469 = vpop.f32.mrb[0].mxu0
  %v470 = vpop.f32.mrb[0].mxu0
  %471 = vdwg.mxu0
  %472 = vmatprep.subr.bf16.mxu0 0
  %473 = vmatpush1.bf16.msra.mxu0 %v346
  %474 = vmatprep.subr.bf16.mxu0 0
  %475 = vmatpush1.bf16.msra.mxu0 %v347
  %476 = vmatprep.subr.bf16.mxu0 0
  %477 = vmatpush1.bf16.msra.mxu0 %v348
  %478 = vmatprep.subr.bf16.mxu0 0
  %479 = vmatpush1.bf16.msra.mxu0 %v349
  %480 = vmatprep.subr.bf16.mxu0 0
  %481 = vmatpush1.bf16.msra.mxu0 %v350
  %482 = vmatprep.subr.bf16.mxu0 0
  %483 = vmatpush1.bf16.msra.mxu0 %v351
  %484 = vmatprep.subr.bf16.mxu0 0
  %485 = vmatpush1.bf16.msra.mxu0 %v352
  %486 = vmatprep.subr.bf16.mxu0 0
  %487 = vmatpush1.bf16.msra.mxu0 %v353
  %488 = vmatprep.subr.bf16.mxu0 0
  %489 = vmatpush1.bf16.msra.mxu0 %v354
  %490 = vmatprep.subr.bf16.mxu0 0
  %491 = vmatpush1.bf16.msra.mxu0 %v355
  %492 = vmatprep.subr.bf16.mxu0 0
  %493 = vmatpush1.bf16.msra.mxu0 %v356
  %494 = vmatprep.subr.bf16.mxu0 0
  %495 = vmatpush1.bf16.msra.mxu0 %v357
  %496 = vmatprep.subr.bf16.mxu0 0
  %497 = vmatpush1.bf16.msra.mxu0 %v358
  %498 = vmatprep.subr.bf16.mxu0 0
  %499 = vmatpush1.bf16.msra.mxu0 %v359
  %500 = vmatprep.subr.bf16.mxu0 0
  %501 = vmatpush1.bf16.msra.mxu0 %v360
  %502 = vmatprep.subr.bf16.mxu0 0
  %503 = vmatpush1.bf16.msra.mxu0 %v361
  %504 = vmatprep.mubr.bf16.mxu0 %v25
  %505 = vmatmul.mubr.bf16.gmra.mrb[0].mxu0 %v24
  %v506 = vpop.f32.mrb[0].mxu0
  %v507 = vadd.f32 %v467, %v506
  %v508 = vpop.f32.mrb[0].mxu0
  %v509 = vpop.f32.mrb[0].mxu0
  %v510 = vpop.f32.mrb[0].mxu0
  %511 = vdwg.mxu0
  %512 = vmatprep.subr.bf16.mxu0 0
  %513 = vmatpush1.bf16.msra.mxu0 %v362
  %514 = vmatprep.subr.bf16.mxu0 0
  %515 = vmatpush1.bf16.msra.mxu0 %v363
  %516 = vmatprep.subr.bf16.mxu0 0
  %517 = vmatpush1.bf16.msra.mxu0 %v364
  %518 = vmatprep.subr.bf16.mxu0 0
  %519 = vmatpush1.bf16.msra.mxu0 %v365
  %520 = vmatprep.subr.bf16.mxu0 0
  %521 = vmatpush1.bf16.msra.mxu0 %v366
  %522 = vmatprep.subr.bf16.mxu0 0
  %523 = vmatpush1.bf16.msra.mxu0 %v367
  %524 = vmatprep.subr.bf16.mxu0 0
  %525 = vmatpush1.bf16.msra.mxu0 %v368
  %526 = vmatprep.subr.bf16.mxu0 0
  %527 = vmatpush1.bf16.msra.mxu0 %v369
  %528 = vmatprep.subr.bf16.mxu0 0
  %529 = vmatpush1.bf16.msra.mxu0 %v370
  %530 = vmatprep.subr.bf16.mxu0 0
  %531 = vmatpush1.bf16.msra.mxu0 %v371
  %532 = vmatprep.subr.bf16.mxu0 0
  %533 = vmatpush1.bf16.msra.mxu0 %v372
  %534 = vmatprep.subr.bf16.mxu0 0
  %535 = vmatpush1.bf16.msra.mxu0 %v373
  %536 = vmatprep.subr.bf16.mxu0 0
  %537 = vmatpush1.bf16.msra.mxu0 %v374
  %538 = vmatprep.subr.bf16.mxu0 0
  %539 = vmatpush1.bf16.msra.mxu0 %v375
  %540 = vmatprep.subr.bf16.mxu0 0
  %541 = vmatpush1.bf16.msra.mxu0 %v376
  %542 = vmatprep.subr.bf16.mxu0 0
  %543 = vmatpush1.bf16.msra.mxu0 %v377
  %544 = vmatprep.mubr.bf16.mxu0 %v27
  %545 = vmatmul.mubr.bf16.gmra.mrb[0].mxu0 %v26
  %v546 = vpop.f32.mrb[0].mxu0
  %v547 = vadd.f32 %v507, %v546
  %v548 = vpop.f32.mrb[0].mxu0
  %v549 = vpop.f32.mrb[0].mxu0
  %v550 = vpop.f32.mrb[0].mxu0
  %551 = vdwg.mxu0
  %552 = vmatprep.subr.bf16.mxu0 0
  %553 = vmatpush1.bf16.msra.mxu0 %v378
  %554 = vmatprep.subr.bf16.mxu0 0
  %555 = vmatpush1.bf16.msra.mxu0 0
  %556 = vmatprep.subr.bf16.mxu0 0
  %557 = vmatpush1.bf16.msra.mxu0 0
  %558 = vmatprep.subr.bf16.mxu0 0
  %559 = vmatpush1.bf16.msra.mxu0 0
  %560 = vmatprep.subr.bf16.mxu0 0
  %561 = vmatpush1.bf16.msra.mxu0 0
  %562 = vmatprep.subr.bf16.mxu0 0
  %563 = vmatpush1.bf16.msra.mxu0 0
  %564 = vmatprep.subr.bf16.mxu0 0
  %565 = vmatpush1.bf16.msra.mxu0 0
  %566 = vmatprep.subr.bf16.mxu0 0
  %567 = vmatpush1.bf16.msra.mxu0 0
  %568 = vmatprep.subr.bf16.mxu0 0
  %569 = vmatpush1.bf16.msra.mxu0 0
  %570 = vmatprep.subr.bf16.mxu0 0
  %571 = vmatpush1.bf16.msra.mxu0 0
  %572 = vmatprep.subr.bf16.mxu0 0
  %573 = vmatpush1.bf16.msra.mxu0 0
  %574 = vmatprep.subr.bf16.mxu0 0
  %575 = vmatpush1.bf16.msra.mxu0 0
  %576 = vmatprep.subr.bf16.mxu0 0
  %577 = vmatpush1.bf16.msra.mxu0 0
  %578 = vmatprep.subr.bf16.mxu0 0
  %579 = vmatpush1.bf16.msra.mxu0 0
  %580 = vmatprep.subr.bf16.mxu0 0
  %581 = vmatpush1.bf16.msra.mxu0 0
  %582 = vmatprep.subr.bf16.mxu0 0
  %583 = vmatpush1.bf16.msra.mxu0 0
  %584 = vmatprep.mubr.bf16.mxu0 0
  %585 = vmatmul.mubr.bf16.gmra.mrb[0].mxu0 %v430
  %v586 = vpop.f32.mrb[0].mxu0
  %v587 = vadd.f32 %v547, %v586
  %v588 = vpop.f32.mrb[0].mxu0
  %v589 = vpop.f32.mrb[0].mxu0
  %v590 = vpop.f32.mrb[0].mxu0
  %591 = vdwg.mxu0
  %v592 = vpack.c.bf16 %v587, %v587
  %593 = vst [vmem:[%s3] sm:$0xf] %v592
  // Predicated region
  $region14: #{net_forward.1} parent=0 // pred_check
    _
  $region15: #{net_forward.1} parent=0 // pred_check_branch
    %595 = sbr.rel (0) target = $region17
  $region16: #{net_forward.1} parent=0 // pred_region
    _
  $region17: #{net_forward.1} parent=0 // pred_fallthru
    _
  // Predicated region
  $region18: #{net_forward.1} parent=0 // pred_check
    _
  $region19: #{net_forward.1} parent=0 // pred_check_branch
    %597 = sbr.rel (0) target = $region21
  $region20: #{net_forward.1} parent=0 // pred_region
    _
  $region21: #{net_forward.1} parent=0 // pred_fallthru
    _

</llo_original>
